<compile_context>
chip_gen: v7x
topology: tpu7x:2x2x1
jax: 0.10.0
libtpu: 0.0.40
codegen_flags: <defaults>
</compile_context>

<pallas_src>
import functools

import jax
import jax.numpy as jnp
from jax.experimental import pallas as pl
from jax.experimental.pallas import tpu as pltpu


def _rmsnorm_kernel(x_ref, scale_ref, o_ref, *, eps: float, n: int):
    # x_ref:     (tile_rows, d_pad) block in VMEM
    # scale_ref: (1, d_pad) gamma, broadcast over rows
    # o_ref:     (tile_rows, d_pad) output block
    # n:         true (unpadded) feature count used as the RMS divisor.
    x = x_ref[...].astype(jnp.float32)
    sum_sq = jnp.sum(x * x, axis=-1, keepdims=True)   # XLU reduce (padded lanes are 0)
    inv_rms = jax.lax.rsqrt(sum_sq * (1.0 / n) + eps)  # EUP slot
    gamma = scale_ref[...].astype(jnp.float32)
    o_ref[...] = (x * inv_rms * gamma).astype(o_ref.dtype)


def _tpu_info():
    """(vmem_capacity_bytes, info_or_None). Conservative 64 MiB fallback."""
    try:
        info = pltpu.get_tpu_info()
        return int(info.vmem_capacity_bytes), info
    except Exception:
        return 64 * 1024 * 1024, None


def _num_tensorcores(info) -> int:
    if info is not None:
        for attr in ("num_cores", "core_count", "num_tensorcores",
                     "tensorcore_count", "cores_per_chip"):
            v = getattr(info, attr, None)
            if v:
                try:
                    return int(v)
                except Exception:
                    pass
    try:
        return max(1, int(getattr(jax.devices()[0], "num_cores", 1)))
    except Exception:
        return 1


def _pick_tile_rows(rows: int, d_pad: int, dtype, vmem_bytes: int,
                    multi_core: bool) -> int:
    """Largest sublane-aligned row tile whose working set fits ~3/4 of VMEM."""
    itemsize = jnp.dtype(dtype).itemsize
    # Sublane packing: 8 rows/vreg for 32-bit, 16 for bf16/fp16, 32 for 8-bit.
    packing = max(8, 32 // max(itemsize, 1))
    if rows <= packing:
        return max(rows, 1)  # single block; block dim == full array dim

    # Working-set bytes per row: double-buffered input + output tiles in the
    # native dtype plus ~3 f32 temporaries (f32 copy of x, squared/normalized
    # intermediates, output staging) inside the kernel body.
    bytes_per_row = d_pad * (4 * itemsize + 3 * 4)
    budget = (vmem_bytes * 3) // 4
    tile = budget // max(bytes_per_row, 1)

    # 1024-row tiles already amortize per-step overhead (~86% of roofline);
    # on 64 MiB-VMEM chips (v7x) cap at 512 (~85%) to keep spill headroom.
    cap = 512 if vmem_bytes <= 64 * 1024 * 1024 else 1024
    tile = min(tile, cap, rows)

    # Round down to the sublane packing so stores stay unmasked.
    tile = max(packing, (tile // packing) * packing)

    # 2-TC chips only: nudge the grid to an even number of steps so both
    # TensorCores get equal work (best effort; a perf hint, not a requirement).
    if multi_core and rows > tile:
        steps = pl.cdiv(rows, tile)
        if steps % 2 == 1:
            target = steps + 1
            t = pl.cdiv(rows, target)
            t = ((t + packing - 1) // packing) * packing  # round UP -> steps <= target
            tile = max(packing, min(tile, t))
    return tile


def rmsnorm(x: jax.Array, scale: jax.Array, eps: float = 1e-5,
            tile_rows=None) -> jax.Array:
    """RMSNorm over the last axis of x, scaled by `scale` (shape (d_model,)).

    NOTE: eps defaults to 1e-5 (module default); LLaMA-2 checkpoints use 1e-6 —
    pass it explicitly when loading real weights.
    """
    orig_shape = x.shape
    d_model = orig_shape[-1]
    assert scale.shape == (d_model,)

    x2d = x.reshape(-1, d_model)
    rows = x2d.shape[0]

    # Lane-pad to a multiple of 128 so output stores are unmasked `vst`
    # (no-op for typical LLM dims like 4096/8192).
    d_pad = ((d_model + 127) // 128) * 128
    scale2d = scale.reshape(1, d_model)
    if d_pad != d_model:
        x2d = jnp.pad(x2d, ((0, 0), (0, d_pad - d_model)))
        scale2d = jnp.pad(scale2d, ((0, 0), (0, d_pad - d_model)))

    vmem_bytes, info = _tpu_info()
    multi_core = (info is not None) and (
        _num_tensorcores(info) >= 2 or vmem_bytes <= 64 * 1024 * 1024)

    if tile_rows is None:
        tile_rows = _pick_tile_rows(rows, d_pad, x.dtype, vmem_bytes, multi_core)
    grid = (pl.cdiv(rows, tile_rows),)

    itemsize = jnp.dtype(x.dtype).itemsize

    # Scoped-VMEM limit: double-buffered tiles + 3 f32 temporaries + gamma,
    # above the default 16/32 MiB cap but under physical capacity.
    needed = tile_rows * d_pad * (4 * itemsize + 3 * 4) + 2 * 4 * d_pad
    vmem_limit = max(min(vmem_bytes * 3 // 4,
                         max(needed + (4 << 20), 32 << 20)),
                     needed)

    cost = pl.CostEstimate(
        flops=4 * rows * d_model,
        transcendentals=rows,
        bytes_accessed=2 * rows * d_model * itemsize + d_model * itemsize,
    )

    kernel = functools.partial(_rmsnorm_kernel, eps=eps, n=d_model)
    out_shape = jax.ShapeDtypeStruct((rows, d_pad), x.dtype)

    def _call(row_semantics):
        return pl.pallas_call(
            kernel,
            out_shape=out_shape,
            grid_spec=pltpu.PrefetchScalarGridSpec(
                num_scalar_prefetch=0,
                grid=grid,
                in_specs=[
                    pl.BlockSpec((tile_rows, d_pad), lambda i: (i, 0)),
                    pl.BlockSpec((1, d_pad), lambda i: (0, 0)),
                ],
                out_specs=pl.BlockSpec((tile_rows, d_pad), lambda i: (i, 0)),
            ),
            compiler_params=pltpu.CompilerParams(
                dimension_semantics=(row_semantics,),
                vmem_limit_bytes=int(vmem_limit)),
            cost_estimate=cost,
        )(x2d, scale2d)

    if multi_core:
        # On 2-TC chips request a real core split of the row axis; plain
        # "parallel" is near-neutral.  Fall back if this chip rejects it.
        try:
            out = _call(pltpu.CORE_PARALLEL)
        except Exception:
            out = _call("parallel")
    else:
        out = _call("parallel")

    if d_pad != d_model:
        out = out[:, :d_model]
    return out.reshape(orig_shape)


def _reference(x, scale, eps):
    xf = x.astype(jnp.float32)
    rms = jnp.sqrt(jnp.sum(xf * xf, axis=-1, keepdims=True) / xf.shape[-1] + eps)
    return (xf / rms * scale.astype(jnp.float32)).astype(x.dtype)


if __name__ == "__main__":
    key = jax.random.PRNGKey(0)
    eps = 1e-5  # module default; LLaMA-2 checkpoints use 1e-6 — pass explicitly.

    # Small, lane-dense smoke test matching the module's forward.
    batch, seq, d_model = 2, 8, 128
    x = jax.random.normal(key, (batch, seq, d_model), dtype=jnp.float32)
    scale = jnp.ones((d_model,), dtype=jnp.float32)  # torch.ones(d_model)

    out = jax.block_until_ready(rmsnorm(x, scale, eps=eps))
    ref = _reference(x, scale, eps)
    assert out.shape == x.shape and out.dtype == x.dtype
    assert jnp.allclose(out, ref, atol=1e-5, rtol=1e-5)

    # Ragged row count (exercises the masked last row-block).
    k2 = jax.random.PRNGKey(1)
    x2 = jax.random.normal(k2, (1003, 256), dtype=jnp.float32)
    s2 = jax.random.normal(jax.random.PRNGKey(2), (256,), dtype=jnp.float32)
    out2 = jax.block_until_ready(rmsnorm(x2, s2, eps=eps))
    assert out2.shape == x2.shape
    assert jnp.allclose(out2, _reference(x2, s2, eps), atol=1e-5, rtol=1e-5)

    # Odd d_model (exercises the lane-padding path; divisor stays the true n).
    k3 = jax.random.PRNGKey(3)
    x3 = jax.random.normal(k3, (5, 7, 96), dtype=jnp.float32)
    s3 = jax.random.normal(jax.random.PRNGKey(4), (96,), dtype=jnp.float32)
    out3 = jax.block_until_ready(rmsnorm(x3, s3, eps=eps))
    assert out3.shape == x3.shape
    assert jnp.allclose(out3, _reference(x3, s3, eps), atol=1e-5, rtol=1e-5)

    print("KERNEL_OK")
</pallas_src>

<mosaic_0001>
module attributes {stable_mosaic.version = 11 : i64} {
  func.func @_rmsnorm_kernel(%arg0: i32, %arg1: memref<16x128xf32, #tpu.memory_space<vmem>>, %arg2: memref<1x128xf32, #tpu.memory_space<vmem>>, %arg3: memref<16x128xf32, #tpu.memory_space<vmem>>) attributes {dimension_semantics = [#tpu.dimension_semantics<parallel>], iteration_bounds = array<i64: 1>, scalar_prefetch = 0 : i64, scratch_operands = 0 : i64, tpu.core_type = #tpu.core_type<tc>, window_params = [{transform_indices = @transform_0, window_bounds = array<i64: 16, 128>}, {pipeline_mode = #tpu.pipeline_mode<synchronous>, transform_indices = @transform_1, window_bounds = array<i64: 1, 128>}, {transform_indices = @transform_2, window_bounds = array<i64: 16, 128>}]} {
    %c0 = arith.constant 0 : index
    %c0_0 = arith.constant 0 : index
    %0 = vector.load %arg1[%c0, %c0_0] : memref<16x128xf32, #tpu.memory_space<vmem>>, vector<16x128xf32>
    %1 = arith.mulf %0, %0 : vector<16x128xf32>
    %cst = arith.constant dense<0.000000e+00> : vector<16xf32>
    %2 = vector.multi_reduction <add>, %1, %cst [1] : vector<16x128xf32> to vector<16xf32>
    %3 = vector.shape_cast %2 : vector<16xf32> to vector<16x1xf32>
    %cst_1 = arith.constant 7.812500e-03 : f32
    %4 = vector.broadcast %cst_1 : f32 to vector<16x1xf32>
    %5 = arith.mulf %3, %4 : vector<16x1xf32>
    %cst_2 = arith.constant 9.99999974E-6 : f32
    %6 = vector.broadcast %cst_2 : f32 to vector<16x1xf32>
    %7 = arith.addf %5, %6 : vector<16x1xf32>
    %8 = math.rsqrt %7 : vector<16x1xf32>
    %c0_3 = arith.constant 0 : index
    %c0_4 = arith.constant 0 : index
    %9 = vector.load %arg2[%c0_3, %c0_4] : memref<1x128xf32, #tpu.memory_space<vmem>>, vector<1x128xf32>
    %10 = vector.broadcast %8 : vector<16x1xf32> to vector<16x128xf32>
    %11 = arith.mulf %0, %10 : vector<16x128xf32>
    %12 = vector.broadcast %9 : vector<1x128xf32> to vector<16x128xf32>
    %13 = arith.mulf %11, %12 : vector<16x128xf32>
    %c0_5 = arith.constant 0 : index
    %c0_6 = arith.constant 0 : index
    %14 = vector.load %arg3[%c0_5, %c0_6] : memref<16x128xf32, #tpu.memory_space<vmem>>, vector<16x128xf32>
    tpu.vector_store %arg3[%c0_5, %c0_6], %13 {strides = array<i32>} : memref<16x128xf32, #tpu.memory_space<vmem>>, vector<16x128xf32>,
    return
  }
  func.func @transform_0(%arg0: i32) -> (i32, i32) {
    %c0_i32 = arith.constant 0 : i32
    %c0_i32_0 = arith.constant 0 : i32
    return %arg0, %c0_i32 : i32, i32
  }
  func.func @transform_1(%arg0: i32) -> (i32, i32) {
    %c0_i32 = arith.constant 0 : i32
    %c0_i32_0 = arith.constant 0 : i32
    %c0_i32_1 = arith.constant 0 : i32
    return %c0_i32, %c0_i32_0 : i32, i32
  }
  func.func @transform_2(%arg0: i32) -> (i32, i32) {
    %c0_i32 = arith.constant 0 : i32
    %c0_i32_0 = arith.constant 0 : i32
    return %arg0, %c0_i32 : i32, i32
  }
}

</mosaic_0001>

<llo_original>
// kernel: tpu_custom_call.1
$region0: #{tpu_custom_call.1}
  #allocation0 [shape = 'u32[]', space=smem, size = 0x4, offset = 0x4, fixed_abs, tag = 'smem constant byte address 0x4 - core index']
  #allocation1 [shape = 'u32[144,128]{1,0:T(1,128)}', space=vmem, size = 0x12000, scoped, tag = 'internal scratch']
  %s0 = inlined_call_operand.hbm [shape: f32[16,128], index: 0, kind: input, shape index: {}]
  %s1 = inlined_call_operand.vmem [shape: f32[1,128], index: 1, kind: input, shape index: {}]
  %s2 = inlined_call_operand.hbm [shape: f32[16,128], index: 2, kind: output, shape index: {}]
  %s3 = sld [smem:[#allocation0]]
  $region22: #{tpu_custom_call.1} parent=0
    _
  %s5 = ssub.s32 1, %s3
  %s6 = scalar_select 0, %s5, %s3
  $region1: #{tpu_custom_call.1} parent=0
    #allocation2 [shape = 'u8[8192]{0}', space=vmem, size = 0x2000, scoped, tag = 'input window, operand 0, single buffered']
    #allocation3 [shape = 's32[1]{0}', space=sflag, size = 0x4, scoped, tag = 'scoped memory for tpu_custom_call.1']
    #allocation4 [shape = 's32[1]{0}', space=sflag, size = 0x4, scoped, tag = 'scoped memory for tpu_custom_call.1']
    #allocation5 [shape = 'u8[8192]{0}', space=vmem, size = 0x2000, scoped, tag = 'output window, operand 0, single buffered']
    %7 = vsyncpa [#allocation3], 0
    %8 = vsyncpa [#allocation4], 0
    // Predicated region
    $region2: #{tpu_custom_call.1} parent=1 // pred_check
      _
    $region3: #{tpu_custom_call.1} parent=1 // pred_check_branch
      %10 = sbr.rel (0) target = $region5
    $region4: #{tpu_custom_call.1} parent=1 // pred_region
      %s12 = ssub.s32 256, 256
      %13 = vsyncadd [#allocation3], %s12
      %s14 = sshll.u32 [#allocation2], 4
      %s15 = int_to_ptr.vmem [resolvable:$true] %s14
      %20 = dma.hbm_to_vmem [thread:$0]  %s0, 256, %s15, [#allocation3], 128, 128, 8
    $region5: #{tpu_custom_call.1} parent=1 // pred_fallthru
      _
    // Predicated region
    $region6: #{tpu_custom_call.1} parent=1 // pred_check
      _
    $region7: #{tpu_custom_call.1} parent=1 // pred_check_branch
      %22 = sbr.rel (0) target = $region9
    $region8: #{tpu_custom_call.1} parent=1 // pred_region
      _
    $region9: #{tpu_custom_call.1} parent=1 // pred_fallthru
      _
    // Predicated region
    $region10: #{tpu_custom_call.1} parent=1 // pred_check
      _
    $region11: #{tpu_custom_call.1} parent=1 // pred_check_branch
      %24 = sbr.rel (0) target = $region13
    $region12: #{tpu_custom_call.1} parent=1 // pred_region
      %25 = dma.done [#allocation3], 256
    $region13: #{tpu_custom_call.1} parent=1 // pred_fallthru
      _
    %v26 = vld [vmem:[#allocation2] sm:$0xff]
    %v27 = vld [vmem:[#allocation2 + $0x8] sm:$0xff]
    %v28 = vmul.f32 %v26, %v26
    %v29 = vmul.f32 %v27, %v27
    %30 = vadd.xlane.f32.xlu0 %v28
    %v31 = vpop.xlane.xlu0 %30
    %32 = vadd.xlane.f32.xlu0 %v29
    %v33 = vpop.xlane.xlu0 %32
    %v34 = vmul.f32 %v31, 0.0078125
    %v35 = vmul.f32 %v33, 0.0078125
    %v36 = vadd.f32 %v34, 1e-05
    %v37 = vadd.f32 %v35, 1e-05
    %v38 = vrsqrt.pop %v36
    %v39 = vrsqrt.pop %v37
    %v40 = vld [vmem:[%s1] sm:$0x1]
    %v41 = vmul.f32 %v26, %v38
    %v42 = vmul.f32 %v27, %v39
    %v44 = vlaneseq
    %v45 = vshrl.u32 %v44, 7
    %v46 = vsub.s32 0, %v45
    %v47 = vrot.slane %v40, %v46
    %v49 = vmul.f32 %v41, %v47
    %v50 = vmul.f32 %v42, %v47
    %51 = vst [vmem:[#allocation5] sm:$0xff] %v49
    %52 = vst [vmem:[#allocation5 + $0x8] sm:$0xff] %v50
    // Predicated region
    $region14: #{tpu_custom_call.1} parent=1 // pred_check
      _
    $region15: #{tpu_custom_call.1} parent=1 // pred_check_branch
      %54 = sbr.rel (0) target = $region17
    $region16: #{tpu_custom_call.1} parent=1 // pred_region
      %s56 = ssub.s32 256, 256
      %57 = vsyncadd [#allocation4], %s56
      %s58 = sshll.u32 [#allocation5], 4
      %s59 = int_to_ptr.vmem [resolvable:$true] %s58
      %64 = dma.vmem_to_hbm [thread:$0]  %s59, 256, %s2, [#allocation4], 128, 128, 8
    $region17: #{tpu_custom_call.1} parent=1 // pred_fallthru
      _
    // Predicated region
    $region18: #{tpu_custom_call.1} parent=1 // pred_check
      _
    $region19: #{tpu_custom_call.1} parent=1 // pred_check_branch
      %66 = sbr.rel (0) target = $region21
    $region20: #{tpu_custom_call.1} parent=1 // pred_region
      %67 = dma.done [#allocation4], 256
    $region21: #{tpu_custom_call.1} parent=1 // pred_fallthru
      _
    %68 = vsyncpa [#allocation3], 1
    %69 = vsyncpa [#allocation4], 1

</llo_original>
